<compile_context>
chip_gen: v7x
topology: tpu7x:2x2x1
jax: 0.10.0
libtpu: 0.0.40
codegen_flags: <defaults>
</compile_context>

<pallas_src>
import functools

import jax
import jax.numpy as jnp
from jax.experimental import pallas as pl
from jax.experimental.pallas import tpu as pltpu


WINDOW_SIZE = 35


def _round_up(x, m):
    return ((x + m - 1) // m) * m


# ---------------------------------------------------------------------------
# Tiled Linear (y = x @ w + b) kernel — used for every nn.Linear in the module.
# ---------------------------------------------------------------------------
def _linear_kernel(x_ref, w_ref, b_ref, o_ref, acc_ref):
    @pl.when(pl.program_id(2) == 0)
    def _init():
        acc_ref[...] = jnp.zeros_like(acc_ref)

    acc_ref[...] += jnp.dot(x_ref[...], w_ref[...],
                            preferred_element_type=jnp.float32)

    @pl.when(pl.program_id(2) == pl.num_programs(2) - 1)
    def _finalize():
        o_ref[...] = (acc_ref[...] + b_ref[...].astype(jnp.float32)
                      ).astype(o_ref.dtype)


def linear_pallas(x, w, b=None, *, tm=256, tn=512, tk=512,
                  compute_dtype=jnp.bfloat16, out_dtype=None):
    """x: (..., K) @ w: (K, N) (+ b: (N,)) -> (..., N).

    bf16 MXU operands / f32 accumulation by default (pass compute_dtype=None
    or jnp.float32 for strict f32 parity with the PyTorch module).
    """
    lead = x.shape[:-1]
    K = x.shape[-1]
    Kw, N = w.shape
    assert K == Kw, (K, Kw)
    out_dtype = out_dtype if out_dtype is not None else x.dtype

    x2 = x.reshape(-1, K)
    M = x2.shape[0]

    if compute_dtype is not None:
        x2 = x2.astype(compute_dtype)
        w = w.astype(compute_dtype)

    # Row tile: as large as possible, 8-aligned; pad M up (no divisibility assert).
    tm_eff = min(tm, _round_up(M, 8))
    Mp = _round_up(M, tm_eff)
    # Lane-dense output: pad N up to a multiple of 128 (unmasked vst stores).
    Np = _round_up(N, 128)
    tn_eff = Np if Np <= tn else tn
    Np = _round_up(Np, tn_eff)
    # Reduction (K) tiling with f32 VMEM accumulator (bounds VMEM per step).
    tk_eff = K if K <= tk else tk
    Kp = _round_up(K, tk_eff)

    if Mp != M:
        x2 = jnp.pad(x2, ((0, Mp - M), (0, 0)))
    if Kp != K:
        x2 = jnp.pad(x2, ((0, 0), (0, Kp - K)))
        w = jnp.pad(w, ((0, Kp - K), (0, 0)))
    if Np != N:
        w = jnp.pad(w, ((0, 0), (0, Np - N)))
    if b is None:
        b2 = jnp.zeros((1, Np), jnp.float32)
    else:
        b2 = jnp.pad(b.astype(jnp.float32).reshape(1, N), ((0, 0), (0, Np - N)))

    grid = (Mp // tm_eff, Np // tn_eff, Kp // tk_eff)

    bytes_acc = int(x2.size * x2.dtype.itemsize + w.size * w.dtype.itemsize
                    + b2.size * 4 + Mp * Np * jnp.dtype(out_dtype).itemsize)
    cost = pl.CostEstimate(flops=2 * M * K * N, transcendentals=0,
                           bytes_accessed=bytes_acc)

    out = pl.pallas_call(
        _linear_kernel,
        out_shape=jax.ShapeDtypeStruct((Mp, Np), out_dtype),
        grid_spec=pltpu.PrefetchScalarGridSpec(
            num_scalar_prefetch=0,
            grid=grid,
            in_specs=[
                pl.BlockSpec((tm_eff, tk_eff), lambda i, j, k: (i, k)),
                pl.BlockSpec((tk_eff, tn_eff), lambda i, j, k: (k, j)),
                pl.BlockSpec((1, tn_eff), lambda i, j, k: (0, j)),
            ],
            out_specs=pl.BlockSpec((tm_eff, tn_eff), lambda i, j, k: (i, j)),
            scratch_shapes=[pltpu.VMEM((tm_eff, tn_eff), jnp.float32)],
        ),
        compiler_params=pltpu.CompilerParams(
            dimension_semantics=("parallel", "parallel", "arbitrary"),
            vmem_limit_bytes=32 * 1024 * 1024,
        ),
        cost_estimate=cost,
    )(x2, w, b2)

    return out[:M, :N].reshape(*lead, N)


# ---------------------------------------------------------------------------
# Fused windowed cosine attention kernel (CosineAttention.attend).
# One grid step processes TBW (batch*window) slices for all heads.
# ---------------------------------------------------------------------------
def _window_attn_kernel(temp_ref, q_ref, k_ref, v_ref, pv_ref, bias_ref, o_ref,
                        *, activation, mxu_dtype):
    # q/k/v/o: (TBW, H, n, d); pv: (TBW, n, n) (1.0 = attendable pair);
    # bias: (H, n, n); temp: (1, 1)
    TBW, H, n, d = q_ref.shape

    q = q_ref[...].astype(jnp.float32).reshape(TBW * H, n, d)
    k = k_ref[...].astype(jnp.float32).reshape(TBW * H, n, d)
    v = v_ref[...].astype(jnp.float32).reshape(TBW * H, n, d)

    def _l2norm(t):  # matches F.normalize(p=2, dim=-1, eps=1e-12)
        nrm = jnp.sqrt(jnp.sum(t * t, axis=-1, keepdims=True))
        return t / jnp.maximum(nrm, 1e-12)

    qn = _l2norm(q).astype(mxu_dtype)
    kn = _l2norm(k).astype(mxu_dtype)

    temp = temp_ref[0, 0]
    dots = jnp.einsum('bid,bjd->bij', qn, kn,
                      preferred_element_type=jnp.float32) * temp
    dots = dots.reshape(TBW, H, n, n)
    dots = dots + jnp.broadcast_to(bias_ref[...][None, :, :, :], dots.shape)

    neg = -jnp.finfo(jnp.float32).max
    pv = jnp.broadcast_to(pv_ref[...][:, None, :, :], dots.shape)
    dots = jnp.where(pv > 0.5, dots, neg)   # masked_fill(attn_mask, -finfo.max)

    if activation == 'softmax':
        m = jnp.max(dots, axis=-1, keepdims=True)
        p = jnp.exp(dots - m)
        attn = p / jnp.sum(p, axis=-1, keepdims=True)
    else:  # 'relusq'
        r = jnp.maximum(dots, 0.0)
        attn = r * r

    # TODO(synk): attention dropout omitted (eval/inference forward).
    out = jnp.einsum('bij,bjd->bid',
                     attn.reshape(TBW * H, n, n).astype(mxu_dtype),
                     v.astype(mxu_dtype),
                     preferred_element_type=jnp.float32)
    o_ref[...] = out.reshape(TBW, H, n, d).astype(o_ref.dtype)


def cosine_window_attention_pallas(q, k, v, maskw, pos_bias, temperature, *,
                                   activation='softmax', causal=False,
                                   wins_per_step=8, mxu_dtype=jnp.bfloat16):
    """q, k, v: (B, W, H, n, d); maskw: (B, W, n) bool (True = padded).

    Returns head-merged attention output (B, W, n, H*d).
    NOTE: output lane width is head_dim (module-dictated, < 128); heads are
    merged in the wrapper.
    """
    B, W, H, n, d = q.shape
    BW = B * W

    qb = q.reshape(BW, H, n, d)
    kb = k.reshape(BW, H, n, d)
    vb = v.reshape(BW, H, n, d)

    valid = (~maskw).astype(jnp.float32).reshape(BW, n)
    pairvalid = valid[:, :, None] * valid[:, None, :]            # (BW, n, n)
    if causal:
        allowed = jnp.tril(jnp.ones((n, n), jnp.float32))
        pairvalid = pairvalid * allowed[None]

    TBW = min(wins_per_step, BW)
    BWp = _round_up(BW, TBW)
    if BWp != BW:
        pad = BWp - BW
        qb = jnp.pad(qb, ((0, pad), (0, 0), (0, 0), (0, 0)))
        kb = jnp.pad(kb, ((0, pad), (0, 0), (0, 0), (0, 0)))
        vb = jnp.pad(vb, ((0, pad), (0, 0), (0, 0), (0, 0)))
        pairvalid = jnp.pad(pairvalid, ((0, pad), (0, 0), (0, 0)))

    temp = jnp.asarray(temperature, jnp.float32).reshape(1, 1)
    bias = pos_bias.astype(jnp.float32)

    kernel = functools.partial(_window_attn_kernel, activation=activation,
                               mxu_dtype=mxu_dtype)
    cost = pl.CostEstimate(
        flops=int(4 * BWp * H * n * n * d),
        transcendentals=int(BWp * H * n * n),
        bytes_accessed=int(4 * BWp * H * n * d * 4 + BWp * n * n * 4 + H * n * n * 4),
    )

    out = pl.pallas_call(
        kernel,
        out_shape=jax.ShapeDtypeStruct((BWp, H, n, d), q.dtype),
        grid_spec=pltpu.PrefetchScalarGridSpec(
            num_scalar_prefetch=0,
            grid=(BWp // TBW,),
            in_specs=[
                pl.BlockSpec((1, 1), lambda i: (0, 0)),                # temperature
                pl.BlockSpec((TBW, H, n, d), lambda i: (i, 0, 0, 0)),  # q
                pl.BlockSpec((TBW, H, n, d), lambda i: (i, 0, 0, 0)),  # k
                pl.BlockSpec((TBW, H, n, d), lambda i: (i, 0, 0, 0)),  # v
                pl.BlockSpec((TBW, n, n), lambda i: (i, 0, 0)),        # pair mask
                pl.BlockSpec((H, n, n), lambda i: (0, 0, 0)),          # pos bias
            ],
            out_specs=pl.BlockSpec((TBW, H, n, d), lambda i: (i, 0, 0, 0)),
        ),
        compiler_params=pltpu.CompilerParams(
            dimension_semantics=("parallel",),
            vmem_limit_bytes=32 * 1024 * 1024,
        ),
        cost_estimate=cost,
    )(temp, qb, kb, vb, pairvalid, bias)

    out = out[:BW].reshape(B, W, H, n, d)
    # 'b w h n d -> b w n (h d)'
    return jnp.transpose(out, (0, 1, 3, 2, 4)).reshape(B, W, n, H * d)


# ---------------------------------------------------------------------------
# Wrapper plumbing shared with the reference.
# ---------------------------------------------------------------------------
def pad_to_window_size_jax(x, window_size, mask):
    B, N, C = x.shape
    pad_len = (window_size - N % window_size) % window_size
    if pad_len:
        x = jnp.pad(x, ((0, 0), (0, pad_len), (0, 0)))
        mask = jnp.pad(mask, ((0, 0), (0, pad_len)), constant_values=True)
    return x, pad_len, mask


def scaled_sinu_embedding(n, dim, scale):
    inv_freq = 1.0 / (10000.0 ** (jnp.arange(0, dim, 2, dtype=jnp.float32) / dim))
    t = jnp.arange(n, dtype=jnp.float32)
    sinu = t[:, None] * inv_freq[None, :]
    return jnp.concatenate([jnp.sin(sinu), jnp.cos(sinu)], axis=-1) * scale


# ---------------------------------------------------------------------------
# Full CosineAttention forward (Pallas path).
# ---------------------------------------------------------------------------
def cosine_attention_forward(params, x, pos_fn, mask=None, *, n_heads, head_dim,
                             activation='softmax', causal=False,
                             window_size=WINDOW_SIZE, mxu_dtype=jnp.bfloat16):
    assert activation in ('relusq', 'softmax')
    B, N, C = x.shape
    H, D = n_heads, head_dim
    if mask is None:
        mask = jnp.zeros((B, N), dtype=bool)

    xp, pad_n, maskp = pad_to_window_size_jax(x, window_size, mask)
    W = xp.shape[1] // window_size
    n = window_size
    xw = xp.reshape(B, W, n, C)
    maskw = maskp.reshape(B, W, n)

    # qkv projection (Pallas matmul); 'b w n (h d qkv)' factorization.
    qkv = linear_pallas(xw, params['qkv_w'], compute_dtype=mxu_dtype)
    qkv = qkv.reshape(B, W, n, H, D, 3)
    q = jnp.transpose(qkv[..., 0], (0, 1, 3, 2, 4))   # (B, W, H, n, D)
    k = jnp.transpose(qkv[..., 1], (0, 1, 3, 2, 4))
    v = jnp.transpose(qkv[..., 2], (0, 1, 3, 2, 4))

    pos_bias = pos_fn(n)                              # (H, n, n)

    att = cosine_window_attention_pallas(
        q, k, v, maskw, pos_bias, params['temperature'],
        activation=activation, causal=causal, mxu_dtype=mxu_dtype)
    # att: (B, W, n, H*D)

    # ---- window_embeddings (WE_layer) ----
    F_ = H * D
    P = F_ // 2
    Vd = F_ // 4
    valid = (~maskw).astype(jnp.float32)
    lengths = jnp.maximum(jnp.sum(valid, -1)[..., None, None], 1.0)
    we = att * valid[..., None]
    we = linear_pallas(we, params['we_lin_in_w'], compute_dtype=mxu_dtype)
    we = jnp.sum(we, axis=-2, keepdims=True) / lengths
    we = jnp.maximum(we, 0.0)                                      # ReLU
    we_q = linear_pallas(we, params['we_q_w'], compute_dtype=mxu_dtype)
    v_we = linear_pallas(att, params['we_v_w'], compute_dtype=mxu_dtype)
    k_we = linear_pallas(att, params['we_k_w'], compute_dtype=mxu_dtype)
    k_we = k_we + scaled_sinu_embedding(n, P, params['we_pos_scale'])

    # Single-query (1 x n) pooling attention per window: negligible compute,
    # kept in plain jnp.  TODO(synk): WE dropout omitted (eval forward).
    dots = jnp.einsum('bwid,bwjd->bwij', we_q, k_we,
                      precision=jax.lax.Precision.HIGHEST) * (P ** -0.5)
    neg = -jnp.finfo(jnp.float32).max
    dots = jnp.where(maskw[:, :, None, :], neg, dots)
    attnw = jax.nn.softmax(dots, axis=-1)
    ow = jnp.einsum('bwij,bwjd->bwid', attnw, v_we,
                    precision=jax.lax.Precision.HIGHEST)           # (B, W, 1, Vd)
    bos = jnp.broadcast_to(params['we_bos'], (B, 1, 1, Vd))
    ow = jnp.concatenate([bos, ow], axis=1)[:, :-1]                # shift windows
    we_out = jnp.concatenate([att, jnp.broadcast_to(ow, (B, W, n, Vd))], axis=-1)

    out = linear_pallas(we_out, params['out_w'], compute_dtype=mxu_dtype)
    out = out.reshape(B, W * n, C)
    return out[:, :N]                                              # unpad


# ---------------------------------------------------------------------------
# Pure-JAX reference (mirrors the PyTorch module, same bf16 MXU operands).
# ---------------------------------------------------------------------------
def cosine_attention_ref(params, x, pos_fn, mask=None, *, n_heads, head_dim,
                         activation='softmax', causal=False,
                         window_size=WINDOW_SIZE, mxu_dtype=jnp.bfloat16):
    B, N, C = x.shape
    H, D = n_heads, head_dim
    if mask is None:
        mask = jnp.zeros((B, N), dtype=bool)
    xp, pad_n, maskp = pad_to_window_size_jax(x, window_size, mask)
    W = xp.shape[1] // window_size
    n = window_size
    xw = xp.reshape(B, W, n, C)
    maskw = maskp.reshape(B, W, n)

    def mm(a, w):
        return jnp.einsum('...k,kn->...n', a.astype(mxu_dtype), w.astype(mxu_dtype),
                          preferred_element_type=jnp.float32)

    qkv = mm(xw, params['qkv_w']).reshape(B, W, n, H, D, 3)
    q = jnp.transpose(qkv[..., 0], (0, 3, 1, 2, 4))   # (B, H, W, n, D)
    k = jnp.transpose(qkv[..., 1], (0, 3, 1, 2, 4))
    v = jnp.transpose(qkv[..., 2], (0, 3, 1, 2, 4))

    def l2n(t):
        nrm = jnp.sqrt(jnp.sum(t * t, axis=-1, keepdims=True))
        return t / jnp.maximum(nrm, 1e-12)

    qn = l2n(q).astype(mxu_dtype)
    kn = l2n(k).astype(mxu_dtype)
    dots = jnp.einsum('bhwid,bhwjd->bhwij', qn, kn,
                      preferred_element_type=jnp.float32) * params['temperature']
    dots = dots + pos_fn(n)[:, None]
    qkm = ~maskw
    attn_mask = ~(qkm[:, None, :, :, None] & qkm[:, None, :, None, :])
    if causal:
        attn_mask = attn_mask | jnp.triu(jnp.ones((n, n), dtype=bool), 1)
    neg = -jnp.finfo(jnp.float32).max
    dots = jnp.where(attn_mask, neg, dots)
    if activation == 'softmax':
        attn = jax.nn.softmax(dots, axis=-1)
    else:
        attn = jnp.square(jnp.maximum(dots, 0.0))
    out = jnp.einsum('bhwij,bhwjd->bhwid', attn.astype(mxu_dtype),
                     v.astype(mxu_dtype), preferred_element_type=jnp.float32)
    out = jnp.transpose(out, (0, 2, 3, 1, 4)).reshape(B, W, n, H * D)

    F_ = H * D
    P = F_ // 2
    Vd = F_ // 4
    valid = (~maskw).astype(jnp.float32)
    lengths = jnp.maximum(jnp.sum(valid, -1)[..., None, None], 1.0)
    we = out * valid[..., None]
    we = mm(we, params['we_lin_in_w'])
    we = jnp.sum(we, axis=-2, keepdims=True) / lengths
    we = jnp.maximum(we, 0.0)
    we_q = mm(we, params['we_q_w'])
    v_we = mm(out, params['we_v_w'])
    k_we = mm(out, params['we_k_w']) + scaled_sinu_embedding(n, P, params['we_pos_scale'])
    dots2 = jnp.einsum('bwid,bwjd->bwij', we_q, k_we,
                       precision=jax.lax.Precision.HIGHEST) * (P ** -0.5)
    dots2 = jnp.where(maskw[:, :, None, :], neg, dots2)
    attn2 = jax.nn.softmax(dots2, axis=-1)
    ow = jnp.einsum('bwij,bwjd->bwid', attn2, v_we,
                    precision=jax.lax.Precision.HIGHEST)
    bos = jnp.broadcast_to(params['we_bos'], (B, 1, 1, Vd))
    ow = jnp.concatenate([bos, ow], axis=1)[:, :-1]
    we_out = jnp.concatenate([out, jnp.broadcast_to(ow, (B, W, n, Vd))], axis=-1)

    y = mm(we_out, params['out_w']).reshape(B, W * n, C)
    return y[:, :N]


def make_pos_fn(n_heads):
    def pos_fn(n):
        i = jnp.arange(n, dtype=jnp.float32)
        rel = jnp.abs(i[:, None] - i[None, :])
        slopes = (jnp.arange(1, n_heads + 1, dtype=jnp.float32) / n_heads) * 0.02
        return -slopes[:, None, None] * rel          # (H, n, n)
    return pos_fn


if __name__ == "__main__":
    key = jax.random.PRNGKey(0)
    keys = jax.random.split(key, 8)

    B, N = 2, 40
    n_feats, n_heads, head_dim = 32, 4, 8   # module requires n_heads*head_dim == n_feats
    F_ = n_heads * head_dim
    P, Vd = F_ // 2, F_ // 4

    params = {
        'qkv_w': jax.random.normal(keys[0], (n_feats, 3 * n_heads * head_dim), jnp.float32) * 0.2,
        'out_w': jax.random.normal(keys[1], (F_ + Vd, n_feats), jnp.float32) * 0.2,
        'temperature': jnp.float32(15.5),
        'we_lin_in_w': jax.random.normal(keys[2], (F_, P), jnp.float32) * 0.2,
        'we_q_w': jax.random.normal(keys[3], (P, P), jnp.float32) * 0.2,
        'we_k_w': jax.random.normal(keys[4], (F_, P), jnp.float32) * 0.2,
        'we_v_w': jax.random.normal(keys[5], (F_, Vd), jnp.float32) * 0.2,
        'we_bos': jnp.zeros((1, 1, 1, Vd), jnp.float32),
        'we_pos_scale': jnp.float32(1.0),
    }

    x = jax.random.normal(keys[6], (B, N, n_feats), jnp.float32)
    # Ragged padding mask (True = padded), exercising the mask path.
    lengths = jnp.array([N, 33])
    mask = jnp.arange(N)[None, :] >= lengths[:, None]

    pos_fn = make_pos_fn(n_heads)

    out = cosine_attention_forward(params, x, pos_fn, mask,
                                   n_heads=n_heads, head_dim=head_dim,
                                   activation='softmax', causal=False)
    out = jax.block_until_ready(out)

    ref = cosine_attention_ref(params, x, pos_fn, mask,
                               n_heads=n_heads, head_dim=head_dim,
                               activation='softmax', causal=False)

    assert out.shape == (B, N, n_feats), out.shape
    err = float(jnp.max(jnp.abs(out - ref)))
    # Tolerance sized for bf16 MXU operands (f32 accumulation) in both paths.
    assert err < 1e-2, f"mismatch vs reference: max abs err = {err}"

    print("KERNEL_OK")
</pallas_src>

<mosaic_0001>
module attributes {stable_mosaic.version = 11 : i64} {
  func.func @_linear_kernel(%arg0: i32, %arg1: i32, %arg2: i32, %arg3: memref<144x32xbf16, #tpu.memory_space<vmem>>, %arg4: memref<32x128xbf16, #tpu.memory_space<vmem>>, %arg5: memref<1x128xf32, #tpu.memory_space<vmem>>, %arg6: memref<144x128xf32, #tpu.memory_space<vmem>>, %arg7: memref<144x128xf32, #tpu.memory_space<vmem>>) attributes {dimension_semantics = [#tpu.dimension_semantics<parallel>, #tpu.dimension_semantics<parallel>, #tpu.dimension_semantics<arbitrary>], iteration_bounds = array<i64: 1, 1, 1>, scalar_prefetch = 0 : i64, scratch_operands = 1 : i64, tpu.core_type = #tpu.core_type<tc>, window_params = [{transform_indices = @transform_0, window_bounds = array<i64: 144, 32>}, {transform_indices = @transform_1, window_bounds = array<i64: 32, 128>}, {transform_indices = @transform_2, window_bounds = array<i64: 1, 128>}, {transform_indices = @transform_3, window_bounds = array<i64: 144, 128>}]} {
    %c0_i32 = arith.constant 0 : i32
    %0 = arith.cmpi eq, %arg2, %c0_i32 : i32
    %1 = arith.extui %0 : i1 to i32
    %c0_i32_0 = arith.constant 0 : i32
    %2 = arith.cmpi ne, %1, %c0_i32_0 : i32
    scf.if %2 {
      %cst_10 = arith.constant 0.000000e+00 : f32
      %12 = vector.broadcast %cst_10 : f32 to vector<144x128xf32>
      %c0_11 = arith.constant 0 : index
      %c0_12 = arith.constant 0 : index
      %13 = vector.load %arg7[%c0_11, %c0_12] : memref<144x128xf32, #tpu.memory_space<vmem>>, vector<144x128xf32>
      tpu.vector_store %arg7[%c0_11, %c0_12], %12 {strides = array<i32>} : memref<144x128xf32, #tpu.memory_space<vmem>>, vector<144x128xf32>,
    } else {
    }
    %c0 = arith.constant 0 : index
    %c0_1 = arith.constant 0 : index
    %3 = vector.load %arg7[%c0, %c0_1] : memref<144x128xf32, #tpu.memory_space<vmem>>, vector<144x128xf32>
    %c0_2 = arith.constant 0 : index
    %c0_3 = arith.constant 0 : index
    %4 = vector.load %arg3[%c0_2, %c0_3] : memref<144x32xbf16, #tpu.memory_space<vmem>>, vector<144x32xbf16>
    %c0_4 = arith.constant 0 : index
    %c0_5 = arith.constant 0 : index
    %5 = vector.load %arg4[%c0_4, %c0_5] : memref<32x128xbf16, #tpu.memory_space<vmem>>, vector<32x128xbf16>
    %cst = arith.constant dense<0.000000e+00> : vector<144x128xf32>
    %6 = tpu.matmul %4, %5, %cst {dimension_numbers = #tpu.dot_dimension_numbers<[1], [0], [0], [1], [0, 0, 1, 1], [], []>} : vector<144x32xbf16>, vector<32x128xbf16>, vector<144x128xf32> -> vector<144x128xf32>
    %7 = arith.addf %3, %6 : vector<144x128xf32>
    %c0_6 = arith.constant 0 : index
    %c0_7 = arith.constant 0 : index
    %8 = vector.load %arg7[%c0_6, %c0_7] : memref<144x128xf32, #tpu.memory_space<vmem>>, vector<144x128xf32>
    tpu.vector_store %arg7[%c0_6, %c0_7], %7 {strides = array<i32>} : memref<144x128xf32, #tpu.memory_space<vmem>>, vector<144x128xf32>,
    %c0_i32_8 = arith.constant 0 : i32
    %9 = arith.cmpi eq, %arg2, %c0_i32_8 : i32
    %10 = arith.extui %9 : i1 to i32
    %c0_i32_9 = arith.constant 0 : i32
    %11 = arith.cmpi ne, %10, %c0_i32_9 : i32
    scf.if %11 {
      %c0_10 = arith.constant 0 : index
      %c0_11 = arith.constant 0 : index
      %12 = vector.load %arg7[%c0_10, %c0_11] : memref<144x128xf32, #tpu.memory_space<vmem>>, vector<144x128xf32>
      %c0_12 = arith.constant 0 : index
      %c0_13 = arith.constant 0 : index
      %13 = vector.load %arg5[%c0_12, %c0_13] : memref<1x128xf32, #tpu.memory_space<vmem>>, vector<1x128xf32>
      %14 = vector.broadcast %13 : vector<1x128xf32> to vector<144x128xf32>
      %15 = arith.addf %12, %14 : vector<144x128xf32>
      %c0_14 = arith.constant 0 : index
      %c0_15 = arith.constant 0 : index
      %16 = vector.load %arg6[%c0_14, %c0_15] : memref<144x128xf32, #tpu.memory_space<vmem>>, vector<144x128xf32>
      tpu.vector_store %arg6[%c0_14, %c0_15], %15 {strides = array<i32>} : memref<144x128xf32, #tpu.memory_space<vmem>>, vector<144x128xf32>,
    } else {
    }
    return
  }
  func.func @transform_0(%arg0: i32, %arg1: i32, %arg2: i32) -> (i32, i32) {
    %c0_i32 = arith.constant 0 : i32
    return %arg0, %arg2 : i32, i32
  }
  func.func @transform_1(%arg0: i32, %arg1: i32, %arg2: i32) -> (i32, i32) {
    %c0_i32 = arith.constant 0 : i32
    return %arg2, %arg1 : i32, i32
  }
  func.func @transform_2(%arg0: i32, %arg1: i32, %arg2: i32) -> (i32, i32) {
    %c0_i32 = arith.constant 0 : i32
    %c0_i32_0 = arith.constant 0 : i32
    return %c0_i32, %arg1 : i32, i32
  }
  func.func @transform_3(%arg0: i32, %arg1: i32, %arg2: i32) -> (i32, i32) {
    %c0_i32 = arith.constant 0 : i32
    return %arg0, %arg1 : i32, i32
  }
}

</mosaic_0001>

<llo_original>
// kernel: tpu_custom_call.1
$region0: #{tpu_custom_call.1}
  #allocation0 [shape = 'u32[]', space=smem, size = 0x4, offset = 0x4, fixed_abs, tag = 'smem constant byte address 0x4 - core index']
  #allocation1 [shape = 'u32[144,128]{1,0:T(1,128)}', space=vmem, size = 0x12000, scoped, tag = 'internal scratch']
  #allocation2 [shape = 'f32[144,128]{1,0:T(8,128)}', space=vmem, size = 0x12000, scoped, tag = 'scratch operand']
  %s0 = inlined_call_operand.vmem [shape: bf16[144,32], index: 0, kind: input, shape index: {}]
  %s1 = inlined_call_operand.vmem [shape: bf16[32,128], index: 1, kind: input, shape index: {}]
  %s2 = inlined_call_operand.vmem [shape: f32[1,128], index: 2, kind: input, shape index: {}]
  %s3 = inlined_call_operand.hbm [shape: f32[144,128], index: 3, kind: output, shape index: {}]
  %s4 = sld [smem:[#allocation0]]
  $region30: #{tpu_custom_call.1} parent=0
    _
  %s6 = ssub.s32 1, %s4
  %s7 = scalar_select 0, %s6, %s4
  $region1: #{tpu_custom_call.1} parent=0
    #allocation3 [shape = 'u8[73728]{0}', space=vmem, size = 0x12000, scoped, tag = 'output window, operand 0, single buffered']
    #allocation4 [shape = 's32[1]{0}', space=sflag, size = 0x4, scoped, tag = 'scoped memory for tpu_custom_call.1']
    %8 = vsyncpa [#allocation4], 0
    // Predicated region
    $region2: #{tpu_custom_call.1} parent=1 // pred_check
      _
    $region3: #{tpu_custom_call.1} parent=1 // pred_check_branch
      %10 = sbr.rel (0) target = $region5
    $region4: #{tpu_custom_call.1} parent=1 // pred_region
      _
    $region5: #{tpu_custom_call.1} parent=1 // pred_fallthru
      _
    // Predicated region
    $region6: #{tpu_custom_call.1} parent=1 // pred_check
      _
    $region7: #{tpu_custom_call.1} parent=1 // pred_check_branch
      %12 = sbr.rel (0) target = $region9
    $region8: #{tpu_custom_call.1} parent=1 // pred_region
      _
    $region9: #{tpu_custom_call.1} parent=1 // pred_fallthru
      _
    // Predicated region
    $region10: #{tpu_custom_call.1} parent=1 // pred_check
      _
    $region11: #{tpu_custom_call.1} parent=1 // pred_check_branch
      %14 = sbr.rel (0) target = $region13
    $region12: #{tpu_custom_call.1} parent=1 // pred_region
      _
    $region13: #{tpu_custom_call.1} parent=1 // pred_fallthru
      _
    %p16 = scmp.eq.s32.totalorder 0, 0
    // Predicated region
    $region14: #{tpu_custom_call.1} parent=1 // pred_check
      %p17 = pneg %p16
    $region15: #{tpu_custom_call.1} parent=1 // pred_check_branch
      %19 = sbr.rel (%p17) target = $region17
    $region16: #{tpu_custom_call.1} parent=1 // pred_region
      %20 = vst [vmem:[#allocation2] sm:$0xff] 0.0
      %21 = vst [vmem:[#allocation2 + $0x8] sm:$0xff] 0.0
      %22 = vst [vmem:[#allocation2 + $0x10] sm:$0xff] 0.0
      %23 = vst [vmem:[#allocation2 + $0x18] sm:$0xff] 0.0
      %24 = vst [vmem:[#allocation2 + $0x20] sm:$0xff] 0.0
      %25 = vst [vmem:[#allocation2 + $0x28] sm:$0xff] 0.0
      %26 = vst [vmem:[#allocation2 + $0x30] sm:$0xff] 0.0
      %27 = vst [vmem:[#allocation2 + $0x38] sm:$0xff] 0.0
      %28 = vst [vmem:[#allocation2 + $0x40] sm:$0xff] 0.0
      %29 = vst [vmem:[#allocation2 + $0x48] sm:$0xff] 0.0
      %30 = vst [vmem:[#allocation2 + $0x50] sm:$0xff] 0.0
      %31 = vst [vmem:[#allocation2 + $0x58] sm:$0xff] 0.0
      %32 = vst [vmem:[#allocation2 + $0x60] sm:$0xff] 0.0
      %33 = vst [vmem:[#allocation2 + $0x68] sm:$0xff] 0.0
      %34 = vst [vmem:[#allocation2 + $0x70] sm:$0xff] 0.0
      %35 = vst [vmem:[#allocation2 + $0x78] sm:$0xff] 0.0
      %36 = vst [vmem:[#allocation2 + $0x80] sm:$0xff] 0.0
      %37 = vst [vmem:[#allocation2 + $0x88] sm:$0xff] 0.0
    $region17: #{tpu_custom_call.1} parent=1 // pred_fallthru
      _
    %v38 = vld [vmem:[#allocation2] sm:$0xff]
    %v39 = vld [vmem:[#allocation2 + $0x8] sm:$0xff]
    %v40 = vld [vmem:[#allocation2 + $0x10] sm:$0xff]
    %v41 = vld [vmem:[#allocation2 + $0x18] sm:$0xff]
    %v42 = vld [vmem:[#allocation2 + $0x20] sm:$0xff]
    %v43 = vld [vmem:[#allocation2 + $0x28] sm:$0xff]
    %v44 = vld [vmem:[#allocation2 + $0x30] sm:$0xff]
    %v45 = vld [vmem:[#allocation2 + $0x38] sm:$0xff]
    %v46 = vld [vmem:[#allocation2 + $0x40] sm:$0xff]
    %v47 = vld [vmem:[#allocation2 + $0x48] sm:$0xff]
    %v48 = vld [vmem:[#allocation2 + $0x50] sm:$0xff]
    %v49 = vld [vmem:[#allocation2 + $0x58] sm:$0xff]
    %v50 = vld [vmem:[#allocation2 + $0x60] sm:$0xff]
    %v51 = vld [vmem:[#allocation2 + $0x68] sm:$0xff]
    %v52 = vld [vmem:[#allocation2 + $0x70] sm:$0xff]
    %v53 = vld [vmem:[#allocation2 + $0x78] sm:$0xff]
    %v54 = vld [vmem:[#allocation2 + $0x80] sm:$0xff]
    %v55 = vld [vmem:[#allocation2 + $0x88] sm:$0xff]
    %v56 = vld [vmem:[%s0] sm:$0xf]
    %v57 = vld [vmem:[%s0 + $0x4] sm:$0xf]
    %v58 = vld [vmem:[%s0 + $0x8] sm:$0xf]
    %v59 = vld [vmem:[%s0 + $0xc] sm:$0xf]
    %v60 = vld [vmem:[%s0 + $0x10] sm:$0xf]
    %v61 = vld [vmem:[%s0 + $0x14] sm:$0xf]
    %v62 = vld [vmem:[%s0 + $0x18] sm:$0xf]
    %v63 = vld [vmem:[%s0 + $0x1c] sm:$0xf]
    %v64 = vld [vmem:[%s0 + $0x20] sm:$0xf]
    %v65 = vld [vmem:[%s0 + $0x24] sm:$0xf]
    %v66 = vld [vmem:[%s0 + $0x28] sm:$0xf]
    %v67 = vld [vmem:[%s0 + $0x2c] sm:$0xf]
    %v68 = vld [vmem:[%s0 + $0x30] sm:$0xf]
    %v69 = vld [vmem:[%s0 + $0x34] sm:$0xf]
    %v70 = vld [vmem:[%s0 + $0x38] sm:$0xf]
    %v71 = vld [vmem:[%s0 + $0x3c] sm:$0xf]
    %v72 = vld [vmem:[%s0 + $0x40] sm:$0xf]
    %v73 = vld [vmem:[%s0 + $0x44] sm:$0xf]
    %v74 = vld [vmem:[%s1] sm:$0xf]
    %v75 = vld [vmem:[%s1 + $0x4] sm:$0xf]
    %v76 = vld [vmem:[%s1 + $0x8] sm:$0xf]
    %v77 = vld [vmem:[%s1 + $0xc] sm:$0xf]
    %v96 = vunpack.c.l.b16 %v56
    %v97 = vunpack.c.l.b16 %v57
    %v98 = vunpack.c.l.b16 %v58
    %v99 = vunpack.c.l.b16 %v59
    %v100 = vunpack.c.l.b16 %v60
    %v101 = vunpack.c.l.b16 %v61
    %v102 = vunpack.c.l.b16 %v62
    %v103 = vunpack.c.l.b16 %v63
    %v104 = vunpack.c.l.b16 %v64
    %v105 = vunpack.c.l.b16 %v65
    %v106 = vunpack.c.l.b16 %v66
    %v107 = vunpack.c.l.b16 %v67
    %v108 = vunpack.c.l.b16 %v68
    %v109 = vunpack.c.l.b16 %v69
    %v110 = vunpack.c.l.b16 %v70
    %v111 = vunpack.c.l.b16 %v71
    %v112 = vunpack.c.l.b16 %v72
    %v113 = vunpack.c.l.b16 %v73
    %v114 = vpack.c.b16 %v97, %v96
    %v115 = vpack.c.b16 %v99, %v98
    %v116 = vpack.c.b16 %v101, %v100
    %v117 = vpack.c.b16 %v103, %v102
    %v118 = vpack.c.b16 %v105, %v104
    %v119 = vpack.c.b16 %v107, %v106
    %v120 = vpack.c.b16 %v109, %v108
    %v121 = vpack.c.b16 %v111, %v110
    %v122 = vpack.c.b16 %v113, %v112
    %v127 = vunpack.c.l.b16 %v74
    %v128 = vunpack.c.l.b16 %v75
    %v129 = vunpack.c.l.b16 %v76
    %v130 = vunpack.c.l.b16 %v77
    %v131 = vpack.c.b16 %v128, %v127
    %v132 = vpack.c.b16 %v130, %v129
    %vm135 = vcmask 261120
    %v137 = vsel %vm135, %v114, 0
    %v140 = vsel %vm135, %v115, 0
    %v143 = vsel %vm135, %v116, 0
    %v146 = vsel %vm135, %v117, 0
    %v149 = vsel %vm135, %v118, 0
    %v152 = vsel %vm135, %v119, 0
    %v155 = vsel %vm135, %v120, 0
    %v158 = vsel %vm135, %v121, 0
    %v161 = vsel %vm135, %v122, 0
    %163 = vmatprep.subr.bf16.mxu0 0
    %164 = vmatpush1.bf16.msra.mxu0 %v131
    %165 = vmatprep.subr.bf16.mxu0 0
    %166 = vmatpush1.bf16.msra.mxu0 %v132
    %167 = vmatprep.subr.bf16.mxu0 0
    %168 = vmatpush1.bf16.msra.mxu0 0
    %169 = vmatprep.subr.bf16.mxu0 0
    %170 = vmatpush1.bf16.msra.mxu0 0
    %171 = vmatprep.subr.bf16.mxu0 0
    %172 = vmatpush1.bf16.msra.mxu0 0
    %173 = vmatprep.subr.bf16.mxu0 0
    %174 = vmatpush1.bf16.msra.mxu0 0
    %175 = vmatprep.subr.bf16.mxu0 0
    %176 = vmatpush1.bf16.msra.mxu0 0
    %177 = vmatprep.subr.bf16.mxu0 0
    %178 = vmatpush1.bf16.msra.mxu0 0
    %179 = vmatprep.subr.bf16.mxu0 0
    %180 = vmatpush1.bf16.msra.mxu0 0
    %181 = vmatprep.subr.bf16.mxu0 0
    %182 = vmatpush1.bf16.msra.mxu0 0
    %183 = vmatprep.subr.bf16.mxu0 0
    %184 = vmatpush1.bf16.msra.mxu0 0
    %185 = vmatprep.subr.bf16.mxu0 0
    %186 = vmatpush1.bf16.msra.mxu0 0
    %187 = vmatprep.subr.bf16.mxu0 0
    %188 = vmatpush1.bf16.msra.mxu0 0
    %189 = vmatprep.subr.bf16.mxu0 0
    %190 = vmatpush1.bf16.msra.mxu0 0
    %191 = vmatprep.subr.bf16.mxu0 0
    %192 = vmatpush1.bf16.msra.mxu0 0
    %193 = vmatprep.subr.bf16.mxu0 0
    %194 = vmatpush1.bf16.msra.mxu0 0
    %195 = vmatprep.mubr.bf16.mxu0 0
    %196 = vmatmul.mubr.bf16.gmra.mrb[0].mxu0 %v137
    %v197 = vpop.f32.mrb[0].mxu0
    %v198 = vadd.f32 0.0, %v197
    %v199 = vpop.f32.mrb[0].mxu0
    %v200 = vpop.f32.mrb[0].mxu0
    %v201 = vadd.f32 0.0, %v200
    %v202 = vpop.f32.mrb[0].mxu0
    %203 = vmatprep.mubr.bf16.mxu0 0
    %204 = vmatmul.mubr.bf16.gmra.mrb[0].mxu0 %v140
    %v205 = vpop.f32.mrb[0].mxu0
    %v206 = vadd.f32 0.0, %v205
    %v207 = vpop.f32.mrb[0].mxu0
    %v208 = vpop.f32.mrb[0].mxu0
    %v209 = vadd.f32 0.0, %v208
    %v210 = vpop.f32.mrb[0].mxu0
    %211 = vmatprep.mubr.bf16.mxu0 0
    %212 = vmatmul.mubr.bf16.gmra.mrb[0].mxu0 %v143
    %v213 = vpop.f32.mrb[0].mxu0
    %v214 = vadd.f32 0.0, %v213
    %v215 = vpop.f32.mrb[0].mxu0
    %v216 = vpop.f32.mrb[0].mxu0
    %v217 = vadd.f32 0.0, %v216
    %v218 = vpop.f32.mrb[0].mxu0
    %219 = vmatprep.mubr.bf16.mxu0 0
    %220 = vmatmul.mubr.bf16.gmra.mrb[0].mxu0 %v146
    %v221 = vpop.f32.mrb[0].mxu0
    %v222 = vadd.f32 0.0, %v221
    %v223 = vpop.f32.mrb[0].mxu0
    %v224 = vpop.f32.mrb[0].mxu0
    %v225 = vadd.f32 0.0, %v224
    %v226 = vpop.f32.mrb[0].mxu0
    %227 = vmatprep.mubr.bf16.mxu0 0
    %228 = vmatmul.mubr.bf16.gmra.mrb[0].mxu0 %v149
    %v229 = vpop.f32.mrb[0].mxu0
    %v230 = vadd.f32 0.0, %v229
    %v231 = vpop.f32.mrb[0].mxu0
    %v232 = vpop.f32.mrb[0].mxu0
    %v233 = vadd.f32 0.0, %v232
    %v234 = vpop.f32.mrb[0].mxu0
    %235 = vmatprep.mubr.bf16.mxu0 0
    %236 = vmatmul.mubr.bf16.gmra.mrb[0].mxu0 %v152
    %v237 = vpop.f32.mrb[0].mxu0
    %v238 = vadd.f32 0.0, %v237
    %v239 = vpop.f32.mrb[0].mxu0
    %v240 = vpop.f32.mrb[0].mxu0
    %v241 = vadd.f32 0.0, %v240
    %v242 = vpop.f32.mrb[0].mxu0
    %243 = vmatprep.mubr.bf16.mxu0 0
    %244 = vmatmul.mubr.bf16.gmra.mrb[0].mxu0 %v155
    %v245 = vpop.f32.mrb[0].mxu0
    %v246 = vadd.f32 0.0, %v245
    %v247 = vpop.f32.mrb[0].mxu0
    %v248 = vpop.f32.mrb[0].mxu0
    %v249 = vadd.f32 0.0, %v248
    %v250 = vpop.f32.mrb[0].mxu0
    %251 = vmatprep.mubr.bf16.mxu0 0
    %252 = vmatmul.mubr.bf16.gmra.mrb[0].mxu0 %v158
    %v253 = vpop.f32.mrb[0].mxu0
    %v254 = vadd.f32 0.0, %v253
    %v255 = vpop.f32.mrb[0].mxu0
    %v256 = vpop.f32.mrb[0].mxu0
    %v257 = vadd.f32 0.0, %v256
    %v258 = vpop.f32.mrb[0].mxu0
    %259 = vmatprep.mubr.bf16.mxu0 0
    %260 = vmatmul.mubr.bf16.gmra.mrb[0].mxu0 %v161
    %v261 = vpop.f32.mrb[0].mxu0
    %v262 = vadd.f32 0.0, %v261
    %v263 = vpop.f32.mrb[0].mxu0
    %v264 = vpop.f32.mrb[0].mxu0
    %v265 = vadd.f32 0.0, %v264
    %v266 = vpop.f32.mrb[0].mxu0
    %267 = vdwg.mxu0
    %v268 = vadd.f32 %v38, %v198
    %v269 = vadd.f32 %v39, %v201
    %v270 = vadd.f32 %v40, %v206
    %v271 = vadd.f32 %v41, %v209
    %v272 = vadd.f32 %v42, %v214
    %v273 = vadd.f32 %v43, %v217
    %v274 = vadd.f32 %v44, %v222
    %v275 = vadd.f32 %v45, %v225
    %v276 = vadd.f32 %v46, %v230
    %v277 = vadd.f32 %v47, %v233
    %v278 = vadd.f32 %v48, %v238
    %v279 = vadd.f32 %v49, %v241
    %v280 = vadd.f32 %v50, %v246
    %v281 = vadd.f32 %v51, %v249
    %v282 = vadd.f32 %v52, %v254
    %v283 = vadd.f32 %v53, %v257
    %v284 = vadd.f32 %v54, %v262
    %v285 = vadd.f32 %v55, %v265
    %286 = vst [vmem:[#allocation2] sm:$0xff] %v268
    %287 = vst [vmem:[#allocation2 + $0x8] sm:$0xff] %v269
    %288 = vst [vmem:[#allocation2 + $0x10] sm:$0xff] %v270
    %289 = vst [vmem:[#allocation2 + $0x18] sm:$0xff] %v271
    %290 = vst [vmem:[#allocation2 + $0x20] sm:$0xff] %v272
    %291 = vst [vmem:[#allocation2 + $0x28] sm:$0xff] %v273
    %292 = vst [vmem:[#allocation2 + $0x30] sm:$0xff] %v274
    %293 = vst [vmem:[#allocation2 + $0x38] sm:$0xff] %v275
    %294 = vst [vmem:[#allocation2 + $0x40] sm:$0xff] %v276
    %295 = vst [vmem:[#allocation2 + $0x48] sm:$0xff] %v277
    %296 = vst [vmem:[#allocation2 + $0x50] sm:$0xff] %v278
    %297 = vst [vmem:[#allocation2 + $0x58] sm:$0xff] %v279
    %298 = vst [vmem:[#allocation2 + $0x60] sm:$0xff] %v280
    %299 = vst [vmem:[#allocation2 + $0x68] sm:$0xff] %v281
    %300 = vst [vmem:[#allocation2 + $0x70] sm:$0xff] %v282
    %301 = vst [vmem:[#allocation2 + $0x78] sm:$0xff] %v283
    %302 = vst [vmem:[#allocation2 + $0x80] sm:$0xff] %v284
    %303 = vst [vmem:[#allocation2 + $0x88] sm:$0xff] %v285
    // Predicated region
    $region18: #{tpu_custom_call.1} parent=1 // pred_check
      %p304 = pneg %p16
    $region19: #{tpu_custom_call.1} parent=1 // pred_check_branch
      %306 = sbr.rel (%p304) target = $region21
    $region20: #{tpu_custom_call.1} parent=1 // pred_region
      %v307 = vld [vmem:[#allocation2] sm:$0xff]
      %v308 = vld [vmem:[#allocation2 + $0x8] sm:$0xff]
      %v309 = vld [vmem:[#allocation2 + $0x10] sm:$0xff]
      %v310 = vld [vmem:[#allocation2 + $0x18] sm:$0xff]
      %v311 = vld [vmem:[#allocation2 + $0x20] sm:$0xff]
      %v312 = vld [vmem:[#allocation2 + $0x28] sm:$0xff]
      %v313 = vld [vmem:[#allocation2 + $0x30] sm:$0xff]
      %v314 = vld [vmem:[#allocation2 + $0x38] sm:$0xff]
      %v315 = vld [vmem:[#allocation2 + $0x40] sm:$0xff]
      %v316 = vld [vmem:[#allocation2 + $0x48] sm:$0xff]
      %v317 = vld [vmem:[#allocation2 + $0x50] sm:$0xff]
      %v318 = vld [vmem:[#allocation2 + $0x58] sm:$0xff]
      %v319 = vld [vmem:[#allocation2 + $0x60] sm:$0xff]
      %v320 = vld [vmem:[#allocation2 + $0x68] sm:$0xff]
      %v321 = vld [vmem:[#allocation2 + $0x70] sm:$0xff]
      %v322 = vld [vmem:[#allocation2 + $0x78] sm:$0xff]
      %v323 = vld [vmem:[#allocation2 + $0x80] sm:$0xff]
      %v324 = vld [vmem:[#allocation2 + $0x88] sm:$0xff]
      %v325 = vld [vmem:[%s2] sm:$0x1]
      %v327 = vlaneseq
      %v328 = vshrl.u32 %v327, 7
      %v329 = vsub.s32 0, %v328
      %v330 = vrot.slane %v325, %v329
      %v332 = vadd.f32 %v307, %v330
      %v333 = vadd.f32 %v308, %v330
      %v334 = vadd.f32 %v309, %v330
      %v335 = vadd.f32 %v310, %v330
      %v336 = vadd.f32 %v311, %v330
      %v337 = vadd.f32 %v312, %v330
      %v338 = vadd.f32 %v313, %v330
      %v339 = vadd.f32 %v314, %v330
      %v340 = vadd.f32 %v315, %v330
      %v341 = vadd.f32 %v316, %v330
      %v342 = vadd.f32 %v317, %v330
      %v343 = vadd.f32 %v318, %v330
      %v344 = vadd.f32 %v319, %v330
      %v345 = vadd.f32 %v320, %v330
      %v346 = vadd.f32 %v321, %v330
      %v347 = vadd.f32 %v322, %v330
      %v348 = vadd.f32 %v323, %v330
      %v349 = vadd.f32 %v324, %v330
      %350 = vst [vmem:[#allocation3] sm:$0xff] %v332
      %351 = vst [vmem:[#allocation3 + $0x8] sm:$0xff] %v333
      %352 = vst [vmem:[#allocation3 + $0x10] sm:$0xff] %v334
      %353 = vst [vmem:[#allocation3 + $0x18] sm:$0xff] %v335
      %354 = vst [vmem:[#allocation3 + $0x20] sm:$0xff] %v336
      %355 = vst [vmem:[#allocation3 + $0x28] sm:$0xff] %v337
      %356 = vst [vmem:[#allocation3 + $0x30] sm:$0xff] %v338
      %357 = vst [vmem:[#allocation3 + $0x38] sm:$0xff] %v339
      %358 = vst [vmem:[#allocation3 + $0x40] sm:$0xff] %v340
      %359 = vst [vmem:[#allocation3 + $0x48] sm:$0xff] %v341
      %360 = vst [vmem:[#allocation3 + $0x50] sm:$0xff] %v342
      %361 = vst [vmem:[#allocation3 + $0x58] sm:$0xff] %v343
      %362 = vst [vmem:[#allocation3 + $0x60] sm:$0xff] %v344
      %363 = vst [vmem:[#allocation3 + $0x68] sm:$0xff] %v345
      %364 = vst [vmem:[#allocation3 + $0x70] sm:$0xff] %v346
      %365 = vst [vmem:[#allocation3 + $0x78] sm:$0xff] %v347
      %366 = vst [vmem:[#allocation3 + $0x80] sm:$0xff] %v348
      %367 = vst [vmem:[#allocation3 + $0x88] sm:$0xff] %v349
    $region21: #{tpu_custom_call.1} parent=1 // pred_fallthru
      _
    // Predicated region
    $region22: #{tpu_custom_call.1} parent=1 // pred_check
      _
    $region23: #{tpu_custom_call.1} parent=1 // pred_check_branch
      %369 = sbr.rel (0) target = $region25
    $region24: #{tpu_custom_call.1} parent=1 // pred_region
      %s371 = ssub.s32 2304, 2304
      %372 = vsyncadd [#allocation4], %s371
      %s373 = sshll.u32 [#allocation3], 4
      %s374 = int_to_ptr.vmem [resolvable:$true] %s373
      %379 = dma.vmem_to_hbm [thread:$0]  %s374, 2304, %s3, [#allocation4], 128, 128, 8
    $region25: #{tpu_custom_call.1} parent=1 // pred_fallthru
      _
    // Predicated region
    $region26: #{tpu_custom_call.1} parent=1 // pred_check
      _
    $region27: #{tpu_custom_call.1} parent=1 // pred_check_branch
      %381 = sbr.rel (0) target = $region29
    $region28: #{tpu_custom_call.1} parent=1 // pred_region
      %382 = dma.done [#allocation4], 2304
    $region29: #{tpu_custom_call.1} parent=1 // pred_fallthru
      _
    %383 = vsyncpa [#allocation4], 1

</llo_original>
